<compile_context>
chip_gen: v7x
topology: tpu7x:2x2x1
jax: 0.10.0
libtpu: 0.0.40
codegen_flags: <defaults>
</compile_context>

<pallas_src>
import functools

import jax
import jax.numpy as jnp
from jax.experimental import pallas as pl
from jax.experimental.pallas import tpu as pltpu

# result[o, b] = sum_k lhs[o, k] * rhs[b, k]   (A @ B^T, "NT" matmul)
_NT_DIMS = (((1,), (1,)), ((), ()))


def _mlp_kernel(x_ref,               # [tile_b, in_dim]  row-major batch tile
                w1_ref, b1_ref,      # [h1, in_dim], [h1, 1]
                w2_ref, b2_ref,      # [h2, h1],     [h2, 1]
                w3_ref, b3_ref,      # [h3, h2],     [h3, 1]
                w4_ref, b4_ref,      # [out, h3],    [out, 1]
                o_ref,               # [out, tile_b] lane-dense output
                *, sub_b):
    tile_b = x_ref.shape[0]
    n_sub = tile_b // sub_b

    # Hoist weight loads and bias broadcasts out of the batch sub-loop
    # (JAX does not CSE broadcast_in_dim; redoing them per iteration wastes VALU).
    w1 = w1_ref[...]
    w2 = w2_ref[...]
    w3 = w3_ref[...]
    w4 = w4_ref[...]
    b1 = jnp.broadcast_to(b1_ref[...], (w1.shape[0], sub_b))
    b2 = jnp.broadcast_to(b2_ref[...], (w2.shape[0], sub_b))
    b3 = jnp.broadcast_to(b3_ref[...], (w3.shape[0], sub_b))
    b4 = jnp.broadcast_to(b4_ref[...], (w4.shape[0], sub_b))

    def body(j, carry):
        start = pl.multiple_of(j * sub_b, 128)
        xs = x_ref[pl.ds(start, sub_b), :]                    # [sub_b, in_dim]

        # Layer 1: contract the (size-3) feature axis of the row-major chunk and
        # land directly in lane-dense [h1, sub_b] (batch on lanes) -- no wrapper- or
        # kernel-side materialized transpose of x.
        h = jax.lax.dot_general(w1, xs, _NT_DIMS,
                                preferred_element_type=jnp.float32) + b1
        h = jnp.maximum(h, 0.0)

        h = jnp.dot(w2, h, preferred_element_type=jnp.float32) + b2
        h = jnp.maximum(h, 0.0)

        h = jnp.dot(w3, h, preferred_element_type=jnp.float32) + b3
        h = jnp.maximum(h, 0.0)

        out = jnp.dot(w4, h, preferred_element_type=jnp.float32) + b4
        o_ref[:, pl.ds(start, sub_b)] = out.astype(o_ref.dtype)
        return carry

    jax.lax.fori_loop(0, n_sub, body, 0, unroll=True)


def _round_up(n, m):
    return ((n + m - 1) // m) * m


def _cdiv(a, b):
    return (a + b - 1) // b


def _detect_num_tensorcores():
    """Best-effort TensorCores-per-chip (v7x: 2, v5e/v6e: 1).  Never raises."""
    try:
        info = pltpu.get_tpu_info()
        for name in ("num_cores", "tensorcores_per_chip", "num_tensorcores",
                     "cores_per_chip", "core_count"):
            n = getattr(info, name, None)
            if isinstance(n, int) and 1 <= n <= 8:
                return n
    except Exception:
        pass
    try:
        kind = jax.devices()[0].device_kind.lower()
        if "7" in kind or "v4" in kind:   # TPU7x (2 TC) / v4 megacore
            return 2
    except Exception:
        pass
    return 1


def _choose_tiling(batch, tile_b, sub_b, num_cores):
    b_lanes = _round_up(max(batch, 1), 128)                 # lane-aligned batch
    tile_b = max(128, (min(tile_b, b_lanes) // 128) * 128)
    n_tiles = _cdiv(b_lanes, tile_b)
    # Only chips with >1 TensorCore benefit from forcing a multi-step grid: the
    # "parallel" axis shards across cores there.  On v5e/v6e (1 TC) extra grid
    # steps are pure serial pipeline overhead, so keep the grid minimal.
    if num_cores > 1 and b_lanes >= num_cores * 128 and n_tiles % num_cores != 0:
        n_tiles = _round_up(n_tiles, num_cores)
        tile_b = max(128, _round_up(_cdiv(b_lanes, n_tiles), 128))
        n_tiles = _round_up(_cdiv(b_lanes, tile_b), num_cores)
    # In-kernel batch sub-loop width: a multiple of 128 that divides tile_b.
    sub_b = max(128, (min(sub_b, tile_b) // 128) * 128)
    while tile_b % sub_b:
        sub_b -= 128
    return n_tiles * tile_b, tile_b, sub_b, n_tiles


def regression_net_forward(x, params, *, tile_b=2048, sub_b=512, num_cores=None):
    """x: [B, input_dim] f32 -> [B] f32 (matches torch .squeeze(-1) when output_dim == 1)."""
    (w1, b1), (w2, b2), (w3, b3), (w4, b4) = params   # W: (out, in), b: (out, 1)
    B, in_dim = x.shape
    out_dim = w4.shape[0]

    if num_cores is None:
        num_cores = _detect_num_tensorcores()
    B_pad, tile_b, sub_b, n_tiles = _choose_tiling(B, tile_b, sub_b, num_cores)

    # Row-major input straight into the kernel: only a cheap batch-dim zero-pad
    # when B is not a multiple of the tile -- no transpose, no feature-dim pad.
    if B_pad != B:
        x = jnp.pad(x, ((0, B_pad - B), (0, 0)))

    def full_spec(arr):
        # Grid-invariant operand: whole (tiny) 2D array resident in VMEM, DMA'd once.
        return pl.BlockSpec(arr.shape, lambda i: (0, 0))

    kernel = functools.partial(_mlp_kernel, sub_b=sub_b)

    out = pl.pallas_call(
        kernel,
        out_shape=jax.ShapeDtypeStruct((out_dim, B_pad), jnp.float32),
        grid_spec=pltpu.PrefetchScalarGridSpec(
            num_scalar_prefetch=0,
            grid=(n_tiles,),
            in_specs=[
                pl.BlockSpec((tile_b, in_dim), lambda i: (i, 0)),   # contiguous x rows
                full_spec(w1), full_spec(b1),
                full_spec(w2), full_spec(b2),
                full_spec(w3), full_spec(b3),
                full_spec(w4), full_spec(b4),
            ],
            out_specs=pl.BlockSpec((out_dim, tile_b), lambda i: (0, i)),  # lane-dense
        ),
        compiler_params=pltpu.CompilerParams(
            dimension_semantics=("parallel",),
        ),
    )(x, w1, b1, w2, b2, w3, b3, w4, b4)

    if B_pad != B:
        out = out[:, :B]                                   # drop batch padding
    return out.reshape(-1) if out_dim == 1 else out.T      # torch .squeeze(-1)


def init_params(key, input_dim=3, hidden_dim=(64, 64, 32), output_dim=1):
    """Deterministic synthetic init. Weights PyTorch-native (out, in), biases (out, 1)."""
    dims = [input_dim, *hidden_dim, output_dim]
    params = []
    for i in range(len(dims) - 1):
        key, kw, kb = jax.random.split(key, 3)
        scale = 1.0 / float(dims[i]) ** 0.5
        w = jax.random.uniform(kw, (dims[i + 1], dims[i]),
                               minval=-scale, maxval=scale, dtype=jnp.float32)
        b = jax.random.uniform(kb, (dims[i + 1], 1),
                               minval=-scale, maxval=scale, dtype=jnp.float32)
        params.append((w, b))
    return params


def reference_forward(x, params):
    (w1, b1), (w2, b2), (w3, b3), (w4, b4) = params
    h = jnp.maximum(x @ w1.T + b1.T, 0.0)
    h = jnp.maximum(h @ w2.T + b2.T, 0.0)
    h = jnp.maximum(h @ w3.T + b3.T, 0.0)
    out = h @ w4.T + b4.T
    return out[..., 0] if out.shape[-1] == 1 else out      # torch .squeeze(-1) semantics


if __name__ == "__main__":
    key = jax.random.PRNGKey(0)
    k_x, k_p, k_x2, k_p2 = jax.random.split(key, 4)

    # Primary config: matches the PyTorch defaults (3 -> 64 -> 64 -> 32 -> 1).
    B, INPUT_DIM = 256, 3
    x = jax.random.normal(k_x, (B, INPUT_DIM), dtype=jnp.float32)
    params = init_params(k_p, input_dim=INPUT_DIM, hidden_dim=(64, 64, 32), output_dim=1)

    y = jax.block_until_ready(regression_net_forward(x, params))
    y_ref = reference_forward(x, params)
    assert y.shape == (B,), y.shape
    assert jnp.allclose(y, y_ref, atol=1e-5, rtol=1e-5), "mismatch vs reference (output_dim=1)"

    # Secondary config: non-128-multiple batch (exercises batch padding + slice) and
    # output_dim > 1 (exercises the no-squeeze branch flagged in review).
    B2 = 200
    x2 = jax.random.normal(k_x2, (B2, INPUT_DIM), dtype=jnp.float32)
    params2 = init_params(k_p2, input_dim=INPUT_DIM, hidden_dim=(64, 64, 32), output_dim=2)
    y2 = jax.block_until_ready(regression_net_forward(x2, params2))
    y2_ref = reference_forward(x2, params2)
    assert y2.shape == (B2, 2), y2.shape
    assert jnp.allclose(y2, y2_ref, atol=1e-5, rtol=1e-5), "mismatch vs reference (output_dim=2)"

    print("KERNEL_OK")
</pallas_src>

<mosaic_0001>
module attributes {stable_mosaic.version = 11 : i64} {
  func.func @_mlp_kernel(%arg0: i32, %arg1: memref<256x3xf32, #tpu.memory_space<vmem>>, %arg2: memref<64x3xf32, #tpu.memory_space<vmem>>, %arg3: memref<64x1xf32, #tpu.memory_space<vmem>>, %arg4: memref<64x64xf32, #tpu.memory_space<vmem>>, %arg5: memref<64x1xf32, #tpu.memory_space<vmem>>, %arg6: memref<32x64xf32, #tpu.memory_space<vmem>>, %arg7: memref<32x1xf32, #tpu.memory_space<vmem>>, %arg8: memref<1x32xf32, #tpu.memory_space<vmem>>, %arg9: memref<1x1xf32, #tpu.memory_space<vmem>>, %arg10: memref<1x256xf32, #tpu.memory_space<vmem>>) attributes {dimension_semantics = [#tpu.dimension_semantics<parallel>], iteration_bounds = array<i64: 1>, scalar_prefetch = 0 : i64, scratch_operands = 0 : i64, tpu.core_type = #tpu.core_type<tc>, window_params = [{transform_indices = @transform_0, window_bounds = array<i64: 256, 3>}, {pipeline_mode = #tpu.pipeline_mode<synchronous>, transform_indices = @transform_1, window_bounds = array<i64: 64, 3>}, {pipeline_mode = #tpu.pipeline_mode<synchronous>, transform_indices = @transform_2, window_bounds = array<i64: 64, 1>}, {pipeline_mode = #tpu.pipeline_mode<synchronous>, transform_indices = @transform_3, window_bounds = array<i64: 64, 64>}, {pipeline_mode = #tpu.pipeline_mode<synchronous>, transform_indices = @transform_4, window_bounds = array<i64: 64, 1>}, {pipeline_mode = #tpu.pipeline_mode<synchronous>, transform_indices = @transform_5, window_bounds = array<i64: 32, 64>}, {pipeline_mode = #tpu.pipeline_mode<synchronous>, transform_indices = @transform_6, window_bounds = array<i64: 32, 1>}, {pipeline_mode = #tpu.pipeline_mode<synchronous>, transform_indices = @transform_7, window_bounds = array<i64: 1, 32>}, {pipeline_mode = #tpu.pipeline_mode<synchronous>, transform_indices = @transform_8, window_bounds = array<i64: 1, 1>}, {transform_indices = @transform_9, window_bounds = array<i64: 1, 256>}]} {
    %c0 = arith.constant 0 : index
    %c0_0 = arith.constant 0 : index
    %0 = vector.load %arg2[%c0, %c0_0] : memref<64x3xf32, #tpu.memory_space<vmem>>, vector<64x3xf32>
    %c0_1 = arith.constant 0 : index
    %c0_2 = arith.constant 0 : index
    %1 = vector.load %arg4[%c0_1, %c0_2] : memref<64x64xf32, #tpu.memory_space<vmem>>, vector<64x64xf32>
    %c0_3 = arith.constant 0 : index
    %c0_4 = arith.constant 0 : index
    %2 = vector.load %arg6[%c0_3, %c0_4] : memref<32x64xf32, #tpu.memory_space<vmem>>, vector<32x64xf32>
    %c0_5 = arith.constant 0 : index
    %c0_6 = arith.constant 0 : index
    %3 = vector.load %arg8[%c0_5, %c0_6] : memref<1x32xf32, #tpu.memory_space<vmem>>, vector<1x32xf32>
    %c0_7 = arith.constant 0 : index
    %c0_8 = arith.constant 0 : index
    %4 = vector.load %arg3[%c0_7, %c0_8] : memref<64x1xf32, #tpu.memory_space<vmem>>, vector<64x1xf32>
    %5 = vector.shape_cast %4 : vector<64x1xf32> to vector<64x1xf32>
    %6 = vector.broadcast %5 : vector<64x1xf32> to vector<64x256xf32>
    %c0_9 = arith.constant 0 : index
    %c0_10 = arith.constant 0 : index
    %7 = vector.load %arg5[%c0_9, %c0_10] : memref<64x1xf32, #tpu.memory_space<vmem>>, vector<64x1xf32>
    %8 = vector.shape_cast %7 : vector<64x1xf32> to vector<64x1xf32>
    %9 = vector.broadcast %8 : vector<64x1xf32> to vector<64x256xf32>
    %c0_11 = arith.constant 0 : index
    %c0_12 = arith.constant 0 : index
    %10 = vector.load %arg7[%c0_11, %c0_12] : memref<32x1xf32, #tpu.memory_space<vmem>>, vector<32x1xf32>
    %11 = vector.shape_cast %10 : vector<32x1xf32> to vector<32x1xf32>
    %12 = vector.broadcast %11 : vector<32x1xf32> to vector<32x256xf32>
    %c0_13 = arith.constant 0 : index
    %c0_14 = arith.constant 0 : index
    %13 = vector.load %arg9[%c0_13, %c0_14] : memref<1x1xf32, #tpu.memory_space<vmem>>, vector<1x1xf32>
    %14 = vector.shape_cast %13 : vector<1x1xf32> to vector<1x1xf32>
    %15 = vector.broadcast %14 : vector<1x1xf32> to vector<1x256xf32>
    %c0_i32 = arith.constant 0 : i32
    %c256_i32 = arith.constant 256 : i32
    %16 = arith.muli %c0_i32, %c256_i32 : i32
    %17 = tpu.assume_multiple %16, 128 : i32
    %18 = arith.index_cast %17 : i32 to index
    %c0_15 = arith.constant 0 : index
    %19 = vector.load %arg1[%18, %c0_15] : memref<256x3xf32, #tpu.memory_space<vmem>>, vector<256x3xf32>
    %cst = arith.constant dense<0.000000e+00> : vector<64x256xf32>
    %20 = tpu.matmul %0, %19, %cst {dimension_numbers = #tpu.dot_dimension_numbers<[1], [1], [0], [0], [0, 0, 1, 0], [], []>} : vector<64x3xf32>, vector<256x3xf32>, vector<64x256xf32> -> vector<64x256xf32>
    %21 = arith.addf %20, %6 : vector<64x256xf32>
    %cst_16 = arith.constant 0.000000e+00 : f32
    %22 = vector.broadcast %cst_16 : f32 to vector<64x256xf32>
    %23 = arith.maximumf %21, %22 : vector<64x256xf32>
    %cst_17 = arith.constant dense<0.000000e+00> : vector<64x256xf32>
    %24 = tpu.matmul %1, %23, %cst_17 {dimension_numbers = #tpu.dot_dimension_numbers<[1], [0], [0], [1], [0, 0, 1, 1], [], []>} : vector<64x64xf32>, vector<64x256xf32>, vector<64x256xf32> -> vector<64x256xf32>
    %25 = arith.addf %24, %9 : vector<64x256xf32>
    %cst_18 = arith.constant 0.000000e+00 : f32
    %26 = vector.broadcast %cst_18 : f32 to vector<64x256xf32>
    %27 = arith.maximumf %25, %26 : vector<64x256xf32>
    %cst_19 = arith.constant dense<0.000000e+00> : vector<32x256xf32>
    %28 = tpu.matmul %2, %27, %cst_19 {dimension_numbers = #tpu.dot_dimension_numbers<[1], [0], [0], [1], [0, 0, 1, 1], [], []>} : vector<32x64xf32>, vector<64x256xf32>, vector<32x256xf32> -> vector<32x256xf32>
    %29 = arith.addf %28, %12 : vector<32x256xf32>
    %cst_20 = arith.constant 0.000000e+00 : f32
    %30 = vector.broadcast %cst_20 : f32 to vector<32x256xf32>
    %31 = arith.maximumf %29, %30 : vector<32x256xf32>
    %cst_21 = arith.constant dense<0.000000e+00> : vector<1x256xf32>
    %32 = tpu.matmul %3, %31, %cst_21 {dimension_numbers = #tpu.dot_dimension_numbers<[1], [0], [0], [1], [0, 0, 1, 1], [], []>} : vector<1x32xf32>, vector<32x256xf32>, vector<1x256xf32> -> vector<1x256xf32>
    %33 = arith.addf %32, %15 : vector<1x256xf32>
    %c0_22 = arith.constant 0 : index
    %34 = arith.index_cast %17 : i32 to index
    %35 = vector.load %arg10[%c0_22, %34] : memref<1x256xf32, #tpu.memory_space<vmem>>, vector<1x256xf32>
    tpu.vector_store %arg10[%c0_22, %34], %33 {strides = array<i32>} : memref<1x256xf32, #tpu.memory_space<vmem>>, vector<1x256xf32>,
    %c1_i32 = arith.constant 1 : i32
    return
  }
  func.func @transform_0(%arg0: i32) -> (i32, i32) {
    %c0_i32 = arith.constant 0 : i32
    %c0_i32_0 = arith.constant 0 : i32
    return %arg0, %c0_i32 : i32, i32
  }
  func.func @transform_1(%arg0: i32) -> (i32, i32) {
    %c0_i32 = arith.constant 0 : i32
    %c0_i32_0 = arith.constant 0 : i32
    %c0_i32_1 = arith.constant 0 : i32
    return %c0_i32, %c0_i32_0 : i32, i32
  }
  func.func @transform_2(%arg0: i32) -> (i32, i32) {
    %c0_i32 = arith.constant 0 : i32
    %c0_i32_0 = arith.constant 0 : i32
    %c0_i32_1 = arith.constant 0 : i32
    return %c0_i32, %c0_i32_0 : i32, i32
  }
  func.func @transform_3(%arg0: i32) -> (i32, i32) {
    %c0_i32 = arith.constant 0 : i32
    %c0_i32_0 = arith.constant 0 : i32
    %c0_i32_1 = arith.constant 0 : i32
    return %c0_i32, %c0_i32_0 : i32, i32
  }
  func.func @transform_4(%arg0: i32) -> (i32, i32) {
    %c0_i32 = arith.constant 0 : i32
    %c0_i32_0 = arith.constant 0 : i32
    %c0_i32_1 = arith.constant 0 : i32
    return %c0_i32, %c0_i32_0 : i32, i32
  }
  func.func @transform_5(%arg0: i32) -> (i32, i32) {
    %c0_i32 = arith.constant 0 : i32
    %c0_i32_0 = arith.constant 0 : i32
    %c0_i32_1 = arith.constant 0 : i32
    return %c0_i32, %c0_i32_0 : i32, i32
  }
  func.func @transform_6(%arg0: i32) -> (i32, i32) {
    %c0_i32 = arith.constant 0 : i32
    %c0_i32_0 = arith.constant 0 : i32
    %c0_i32_1 = arith.constant 0 : i32
    return %c0_i32, %c0_i32_0 : i32, i32
  }
  func.func @transform_7(%arg0: i32) -> (i32, i32) {
    %c0_i32 = arith.constant 0 : i32
    %c0_i32_0 = arith.constant 0 : i32
    %c0_i32_1 = arith.constant 0 : i32
    return %c0_i32, %c0_i32_0 : i32, i32
  }
  func.func @transform_8(%arg0: i32) -> (i32, i32) {
    %c0_i32 = arith.constant 0 : i32
    %c0_i32_0 = arith.constant 0 : i32
    %c0_i32_1 = arith.constant 0 : i32
    return %c0_i32, %c0_i32_0 : i32, i32
  }
  func.func @transform_9(%arg0: i32) -> (i32, i32) {
    %c0_i32 = arith.constant 0 : i32
    %c0_i32_0 = arith.constant 0 : i32
    return %c0_i32, %arg0 : i32, i32
  }
}

</mosaic_0001>

<llo_original>
// kernel: tpu_custom_call.1
$region0: #{tpu_custom_call.1}
  #allocation0 [shape = 'u32[]', space=smem, size = 0x4, offset = 0x4, fixed_abs, tag = 'smem constant byte address 0x4 - core index']
  #allocation1 [shape = 'u32[144,128]{1,0:T(1,128)}', space=vmem, size = 0x12000, scoped, tag = 'internal scratch']
  #allocation2 [shape = 'f32[1,1]{1,0:T(1,128)S(1)}', space=vmem, size = 0x200, scoped, tag = 'scoped memory for tpu_custom_call.1']
  %s0 = inlined_call_operand.vmem [shape: f32[256,3], index: 0, kind: input, shape index: {}]
  %s1 = inlined_call_operand.vmem [shape: f32[64,3], index: 1, kind: input, shape index: {}]
  %s2 = inlined_call_operand.vmem [shape: f32[64,1], index: 2, kind: input, shape index: {}]
  %s3 = inlined_call_operand.vmem [shape: f32[64,64], index: 3, kind: input, shape index: {}]
  %s4 = inlined_call_operand.vmem [shape: f32[64,1], index: 4, kind: input, shape index: {}]
  %s5 = inlined_call_operand.vmem [shape: f32[32,64], index: 5, kind: input, shape index: {}]
  %s6 = inlined_call_operand.vmem [shape: f32[32,1], index: 6, kind: input, shape index: {}]
  %s7 = inlined_call_operand.vmem [shape: f32[1,32], index: 7, kind: input, shape index: {}]
  %s8 = inlined_call_operand.<no memory space> [shape: f32[1,1], index: 8, kind: input, shape index: {}]
  %s9 = inlined_call_operand.hbm [shape: f32[1,256], index: 9, kind: output, shape index: {}]
  %s10 = sld [smem:[#allocation0]]
  $region46: #{tpu_custom_call.1} parent=0
    _
  %s12 = ssub.s32 1, %s10
  %s13 = scalar_select 0, %s12, %s10
  %v14 = vstv %s8
  %15 = vst [vmem:[#allocation2] sm:$0x1] %v14
  $region1: #{tpu_custom_call.1} parent=0
    #allocation3 [shape = 'u8[1024]{0}', space=vmem, size = 0x400, scoped, tag = 'output window, operand 0, single buffered']
    #allocation4 [shape = 's32[1]{0}', space=sflag, size = 0x4, scoped, tag = 'scoped memory for tpu_custom_call.1']
    %16 = vsyncpa [#allocation4], 0
    // Predicated region
    $region2: #{tpu_custom_call.1} parent=1 // pred_check
      _
    $region3: #{tpu_custom_call.1} parent=1 // pred_check_branch
      %18 = sbr.rel (0) target = $region5
    $region4: #{tpu_custom_call.1} parent=1 // pred_region
      _
    $region5: #{tpu_custom_call.1} parent=1 // pred_fallthru
      _
    // Predicated region
    $region6: #{tpu_custom_call.1} parent=1 // pred_check
      _
    $region7: #{tpu_custom_call.1} parent=1 // pred_check_branch
      %20 = sbr.rel (0) target = $region9
    $region8: #{tpu_custom_call.1} parent=1 // pred_region
      _
    $region9: #{tpu_custom_call.1} parent=1 // pred_fallthru
      _
    // Predicated region
    $region10: #{tpu_custom_call.1} parent=1 // pred_check
      _
    $region11: #{tpu_custom_call.1} parent=1 // pred_check_branch
      %22 = sbr.rel (0) target = $region13
    $region12: #{tpu_custom_call.1} parent=1 // pred_region
      _
    $region13: #{tpu_custom_call.1} parent=1 // pred_fallthru
      _
    // Predicated region
    $region14: #{tpu_custom_call.1} parent=1 // pred_check
      _
    $region15: #{tpu_custom_call.1} parent=1 // pred_check_branch
      %24 = sbr.rel (0) target = $region17
    $region16: #{tpu_custom_call.1} parent=1 // pred_region
      _
    $region17: #{tpu_custom_call.1} parent=1 // pred_fallthru
      _
    // Predicated region
    $region18: #{tpu_custom_call.1} parent=1 // pred_check
      _
    $region19: #{tpu_custom_call.1} parent=1 // pred_check_branch
      %26 = sbr.rel (0) target = $region21
    $region20: #{tpu_custom_call.1} parent=1 // pred_region
      _
    $region21: #{tpu_custom_call.1} parent=1 // pred_fallthru
      _
    // Predicated region
    $region22: #{tpu_custom_call.1} parent=1 // pred_check
      _
    $region23: #{tpu_custom_call.1} parent=1 // pred_check_branch
      %28 = sbr.rel (0) target = $region25
    $region24: #{tpu_custom_call.1} parent=1 // pred_region
      _
    $region25: #{tpu_custom_call.1} parent=1 // pred_fallthru
      _
    // Predicated region
    $region26: #{tpu_custom_call.1} parent=1 // pred_check
      _
    $region27: #{tpu_custom_call.1} parent=1 // pred_check_branch
      %30 = sbr.rel (0) target = $region29
    $region28: #{tpu_custom_call.1} parent=1 // pred_region
      _
    $region29: #{tpu_custom_call.1} parent=1 // pred_fallthru
      _
    // Predicated region
    $region30: #{tpu_custom_call.1} parent=1 // pred_check
      _
    $region31: #{tpu_custom_call.1} parent=1 // pred_check_branch
      %32 = sbr.rel (0) target = $region33
    $region32: #{tpu_custom_call.1} parent=1 // pred_region
      _
    $region33: #{tpu_custom_call.1} parent=1 // pred_fallthru
      _
    // Predicated region
    $region34: #{tpu_custom_call.1} parent=1 // pred_check
      _
    $region35: #{tpu_custom_call.1} parent=1 // pred_check_branch
      %34 = sbr.rel (0) target = $region37
    $region36: #{tpu_custom_call.1} parent=1 // pred_region
      _
    $region37: #{tpu_custom_call.1} parent=1 // pred_fallthru
      _
    %v35 = vld [vmem:[%s1] sm:$0xff]
    %v36 = vld [vmem:[%s1 + $0x8] sm:$0xff]
    %v37 = vld [vmem:[%s1 + $0x10] sm:$0xff]
    %v38 = vld [vmem:[%s1 + $0x18] sm:$0xff]
    %v39 = vld [vmem:[%s1 + $0x20] sm:$0xff]
    %v40 = vld [vmem:[%s1 + $0x28] sm:$0xff]
    %v41 = vld [vmem:[%s1 + $0x30] sm:$0xff]
    %v42 = vld [vmem:[%s1 + $0x38] sm:$0xff]
    %v43 = vld [vmem:[%s3] sm:$0xff]
    %v44 = vld [vmem:[%s3 + $0x8] sm:$0xff]
    %v45 = vld [vmem:[%s3 + $0x10] sm:$0xff]
    %v46 = vld [vmem:[%s3 + $0x18] sm:$0xff]
    %v47 = vld [vmem:[%s3 + $0x20] sm:$0xff]
    %v48 = vld [vmem:[%s3 + $0x28] sm:$0xff]
    %v49 = vld [vmem:[%s3 + $0x30] sm:$0xff]
    %v50 = vld [vmem:[%s3 + $0x38] sm:$0xff]
    %v51 = vld [vmem:[%s5] sm:$0xff]
    %v52 = vld [vmem:[%s5 + $0x8] sm:$0xff]
    %v53 = vld [vmem:[%s5 + $0x10] sm:$0xff]
    %v54 = vld [vmem:[%s5 + $0x18] sm:$0xff]
    %v55 = vld [vmem:[%s7] sm:$0x1]
    %v56 = vld [vmem:[%s2] sm:$0xff]
    %v57 = vld [vmem:[%s2 + $0x8] sm:$0xff]
    %v58 = vld [vmem:[%s2 + $0x10] sm:$0xff]
    %v59 = vld [vmem:[%s2 + $0x18] sm:$0xff]
    %v60 = vld [vmem:[%s2 + $0x20] sm:$0xff]
    %v61 = vld [vmem:[%s2 + $0x28] sm:$0xff]
    %v62 = vld [vmem:[%s2 + $0x30] sm:$0xff]
    %v63 = vld [vmem:[%s2 + $0x38] sm:$0xff]
    %65 = vset.pattern.permute.xlu0 0
    %66 = vperm.xlu0 %65, %v56
    %v67 = vpop.permute.xlu0 %66
    %70 = vset.pattern.permute.xlu0 0
    %71 = vperm.xlu0 %70, %v57
    %v72 = vpop.permute.xlu0 %71
    %75 = vset.pattern.permute.xlu0 0
    %76 = vperm.xlu0 %75, %v58
    %v77 = vpop.permute.xlu0 %76
    %80 = vset.pattern.permute.xlu0 0
    %81 = vperm.xlu0 %80, %v59
    %v82 = vpop.permute.xlu0 %81
    %85 = vset.pattern.permute.xlu0 0
    %86 = vperm.xlu0 %85, %v60
    %v87 = vpop.permute.xlu0 %86
    %90 = vset.pattern.permute.xlu0 0
    %91 = vperm.xlu0 %90, %v61
    %v92 = vpop.permute.xlu0 %91
    %95 = vset.pattern.permute.xlu0 0
    %96 = vperm.xlu0 %95, %v62
    %v97 = vpop.permute.xlu0 %96
    %100 = vset.pattern.permute.xlu0 0
    %101 = vperm.xlu0 %100, %v63
    %v102 = vpop.permute.xlu0 %101
    %v104 = vld [vmem:[%s4] sm:$0xff]
    %v105 = vld [vmem:[%s4 + $0x8] sm:$0xff]
    %v106 = vld [vmem:[%s4 + $0x10] sm:$0xff]
    %v107 = vld [vmem:[%s4 + $0x18] sm:$0xff]
    %v108 = vld [vmem:[%s4 + $0x20] sm:$0xff]
    %v109 = vld [vmem:[%s4 + $0x28] sm:$0xff]
    %v110 = vld [vmem:[%s4 + $0x30] sm:$0xff]
    %v111 = vld [vmem:[%s4 + $0x38] sm:$0xff]
    %113 = vset.pattern.permute.xlu0 0
    %114 = vperm.xlu0 %113, %v104
    %v115 = vpop.permute.xlu0 %114
    %118 = vset.pattern.permute.xlu0 0
    %119 = vperm.xlu0 %118, %v105
    %v120 = vpop.permute.xlu0 %119
    %123 = vset.pattern.permute.xlu0 0
    %124 = vperm.xlu0 %123, %v106
    %v125 = vpop.permute.xlu0 %124
    %128 = vset.pattern.permute.xlu0 0
    %129 = vperm.xlu0 %128, %v107
    %v130 = vpop.permute.xlu0 %129
    %133 = vset.pattern.permute.xlu0 0
    %134 = vperm.xlu0 %133, %v108
    %v135 = vpop.permute.xlu0 %134
    %138 = vset.pattern.permute.xlu0 0
    %139 = vperm.xlu0 %138, %v109
    %v140 = vpop.permute.xlu0 %139
    %143 = vset.pattern.permute.xlu0 0
    %144 = vperm.xlu0 %143, %v110
    %v145 = vpop.permute.xlu0 %144
    %148 = vset.pattern.permute.xlu0 0
    %149 = vperm.xlu0 %148, %v111
    %v150 = vpop.permute.xlu0 %149
    %v152 = vld [vmem:[%s6] sm:$0xff]
    %v153 = vld [vmem:[%s6 + $0x8] sm:$0xff]
    %v154 = vld [vmem:[%s6 + $0x10] sm:$0xff]
    %v155 = vld [vmem:[%s6 + $0x18] sm:$0xff]
    %157 = vset.pattern.permute.xlu0 0
    %158 = vperm.xlu0 %157, %v152
    %v159 = vpop.permute.xlu0 %158
    %162 = vset.pattern.permute.xlu0 0
    %163 = vperm.xlu0 %162, %v153
    %v164 = vpop.permute.xlu0 %163
    %167 = vset.pattern.permute.xlu0 0
    %168 = vperm.xlu0 %167, %v154
    %v169 = vpop.permute.xlu0 %168
    %172 = vset.pattern.permute.xlu0 0
    %173 = vperm.xlu0 %172, %v155
    %v174 = vpop.permute.xlu0 %173
    %v176 = vld [vmem:[#allocation2] sm:$0x1]
    %178 = vset.pattern.permute.xlu0 0
    %179 = vperm.xlu0 %178, %v176
    %v180 = vpop.permute.xlu0 %179
    %v182 = vlaneseq
    %v183 = vshrl.u32 %v182, 7
    %v184 = vsub.s32 0, %v183
    %v185 = vrot.slane %v180, %v184
    %v186 = vld [vmem:[%s0] sm:$0xff]
    %v187 = vld [vmem:[%s0 + $0x8] sm:$0xff]
    %v188 = vld [vmem:[%s0 + $0x10] sm:$0xff]
    %v189 = vld [vmem:[%s0 + $0x18] sm:$0xff]
    %v190 = vld [vmem:[%s0 + $0x20] sm:$0xff]
    %v191 = vld [vmem:[%s0 + $0x28] sm:$0xff]
    %v192 = vld [vmem:[%s0 + $0x30] sm:$0xff]
    %v193 = vld [vmem:[%s0 + $0x38] sm:$0xff]
    %v194 = vld [vmem:[%s0 + $0x40] sm:$0xff]
    %v195 = vld [vmem:[%s0 + $0x48] sm:$0xff]
    %v196 = vld [vmem:[%s0 + $0x50] sm:$0xff]
    %v197 = vld [vmem:[%s0 + $0x58] sm:$0xff]
    %v198 = vld [vmem:[%s0 + $0x60] sm:$0xff]
    %v199 = vld [vmem:[%s0 + $0x68] sm:$0xff]
    %v200 = vld [vmem:[%s0 + $0x70] sm:$0xff]
    %v201 = vld [vmem:[%s0 + $0x78] sm:$0xff]
    %v202 = vld [vmem:[%s0 + $0x80] sm:$0xff]
    %v203 = vld [vmem:[%s0 + $0x88] sm:$0xff]
    %v204 = vld [vmem:[%s0 + $0x90] sm:$0xff]
    %v205 = vld [vmem:[%s0 + $0x98] sm:$0xff]
    %v206 = vld [vmem:[%s0 + $0xa0] sm:$0xff]
    %v207 = vld [vmem:[%s0 + $0xa8] sm:$0xff]
    %v208 = vld [vmem:[%s0 + $0xb0] sm:$0xff]
    %v209 = vld [vmem:[%s0 + $0xb8] sm:$0xff]
    %v210 = vld [vmem:[%s0 + $0xc0] sm:$0xff]
    %v211 = vld [vmem:[%s0 + $0xc8] sm:$0xff]
    %v212 = vld [vmem:[%s0 + $0xd0] sm:$0xff]
    %v213 = vld [vmem:[%s0 + $0xd8] sm:$0xff]
    %v214 = vld [vmem:[%s0 + $0xe0] sm:$0xff]
    %v215 = vld [vmem:[%s0 + $0xe8] sm:$0xff]
    %v216 = vld [vmem:[%s0 + $0xf0] sm:$0xff]
    %v217 = vld [vmem:[%s0 + $0xf8] sm:$0xff]
    %vm218 = vcmask 23552
    %v220 = vsel %vm218, %v35, 0
    %v223 = vsel %vm218, %v36, 0
    %v226 = vsel %vm218, %v37, 0
    %v229 = vsel %vm218, %v38, 0
    %v232 = vsel %vm218, %v39, 0
    %v235 = vsel %vm218, %v40, 0
    %v238 = vsel %vm218, %v41, 0
    %v241 = vsel %vm218, %v42, 0
    %v244 = vsel %vm218, %v186, 0
    %v247 = vsel %vm218, %v187, 0
    %v250 = vsel %vm218, %v188, 0
    %v253 = vsel %vm218, %v189, 0
    %v256 = vsel %vm218, %v190, 0
    %v259 = vsel %vm218, %v191, 0
    %v262 = vsel %vm218, %v192, 0
    %v265 = vsel %vm218, %v193, 0
    %v268 = vsel %vm218, %v194, 0
    %v271 = vsel %vm218, %v195, 0
    %v274 = vsel %vm218, %v196, 0
    %v277 = vsel %vm218, %v197, 0
    %v280 = vsel %vm218, %v198, 0
    %v283 = vsel %vm218, %v199, 0
    %v286 = vsel %vm218, %v200, 0
    %v289 = vsel %vm218, %v201, 0
    %v292 = vsel %vm218, %v202, 0
    %v295 = vsel %vm218, %v203, 0
    %v298 = vsel %vm218, %v204, 0
    %v301 = vsel %vm218, %v205, 0
    %v304 = vsel %vm218, %v206, 0
    %v307 = vsel %vm218, %v207, 0
    %v310 = vsel %vm218, %v208, 0
    %v313 = vsel %vm218, %v209, 0
    %v316 = vsel %vm218, %v210, 0
    %v319 = vsel %vm218, %v211, 0
    %v322 = vsel %vm218, %v212, 0
    %v325 = vsel %vm218, %v213, 0
    %v328 = vsel %vm218, %v214, 0
    %v331 = vsel %vm218, %v215, 0
    %v334 = vsel %vm218, %v216, 0
    %v337 = vsel %vm218, %v217, 0
    %339 = vmatprep.subr.mxu0 0.0
    %340 = vmatpush1.xpose.msra.mxu0 %v244
    %341 = vmatprep.subr.mxu0 0.0
    %342 = vmatpush1.xpose.msra.mxu0 %v247
    %343 = vmatprep.subr.mxu0 0.0
    %344 = vmatpush1.xpose.msra.mxu0 %v250
    %345 = vmatprep.subr.mxu0 0.0
    %346 = vmatpush1.xpose.msra.mxu0 %v253
    %347 = vmatprep.subr.mxu0 0.0
    %348 = vmatpush1.xpose.msra.mxu0 %v256
    %349 = vmatprep.subr.mxu0 0.0
    %350 = vmatpush1.xpose.msra.mxu0 %v259
    %351 = vmatprep.subr.mxu0 0.0
    %352 = vmatpush1.xpose.msra.mxu0 %v262
    %353 = vmatprep.subr.mxu0 0.0
    %354 = vmatpush1.xpose.msra.mxu0 %v265
    %355 = vmatprep.subr.mxu0 0.0
    %356 = vmatpush1.xpose.msra.mxu0 %v268
    %357 = vmatprep.subr.mxu0 0.0
    %358 = vmatpush1.xpose.msra.mxu0 %v271
    %359 = vmatprep.subr.mxu0 0.0
    %360 = vmatpush1.xpose.msra.mxu0 %v274
    %361 = vmatprep.subr.mxu0 0.0
    %362 = vmatpush1.xpose.msra.mxu0 %v277
    %363 = vmatprep.subr.mxu0 0.0
    %364 = vmatpush1.xpose.msra.mxu0 %v280
    %365 = vmatprep.subr.mxu0 0.0
    %366 = vmatpush1.xpose.msra.mxu0 %v283
    %367 = vmatprep.subr.mxu0 0.0
    %368 = vmatpush1.xpose.msra.mxu0 %v286
    %369 = vmatprep.subr.mxu0 0.0
    %370 = vmatpush1.xpose.msra.mxu0 %v289
    %371 = vmatprep.subr.mxu0 0.0
    %372 = vmatpush1.xpose.msra.mxu0 %v292
    %373 = vmatprep.subr.mxu0 0.0
    %374 = vmatpush1.xpose.msra.mxu0 %v295
    %375 = vmatprep.subr.mxu0 0.0
    %376 = vmatpush1.xpose.msra.mxu0 %v298
    %377 = vmatprep.subr.mxu0 0.0
    %378 = vmatpush1.xpose.msra.mxu0 %v301
    %379 = vmatprep.subr.mxu0 0.0
    %380 = vmatpush1.xpose.msra.mxu0 %v304
    %381 = vmatprep.subr.mxu0 0.0
    %382 = vmatpush1.xpose.msra.mxu0 %v307
    %383 = vmatprep.subr.mxu0 0.0
    %384 = vmatpush1.xpose.msra.mxu0 %v310
    %385 = vmatprep.subr.mxu0 0.0
    %386 = vmatpush1.xpose.msra.mxu0 %v313
    %387 = vmatprep.subr.mxu0 0.0
    %388 = vmatpush1.xpose.msra.mxu0 %v316
    %389 = vmatprep.subr.mxu0 0.0
    %390 = vmatpush1.xpose.msra.mxu0 %v319
    %391 = vmatprep.subr.mxu0 0.0
    %392 = vmatpush1.xpose.msra.mxu0 %v322
    %393 = vmatprep.subr.mxu0 0.0
    %394 = vmatpush1.xpose.msra.mxu0 %v325
    %395 = vmatprep.subr.mxu0 0.0
    %396 = vmatpush1.xpose.msra.mxu0 %v328
    %397 = vmatprep.subr.mxu0 0.0
    %398 = vmatpush1.xpose.msra.mxu0 %v331
    %399 = vmatprep.subr.mxu0 0.0
    %400 = vmatpush1.xpose.msra.mxu0 %v334
    %401 = vmatprep.subr.mxu0 0.0
    %402 = vmatpush1.xpose.msra.mxu0 %v337
    %403 = vmatprep.mubr.f32.mxu0 0.0
    %404 = vmatmul.mubr.f32.gmra.mrb[0].mxu0 %v220
    %v405 = vpop.f32.mrb[0].mxu0
    %v406 = vadd.f32 %v67, %v405
    %v407 = vpop.f32.mrb[0].mxu0
    %v408 = vadd.f32 %v67, %v407
    %409 = vmatprep.mubr.f32.mxu0 0.0
    %410 = vmatmul.mubr.f32.gmra.mrb[0].mxu0 %v223
    %v411 = vpop.f32.mrb[0].mxu0
    %v412 = vadd.f32 %v72, %v411
    %v413 = vpop.f32.mrb[0].mxu0
    %v414 = vadd.f32 %v72, %v413
    %415 = vmatprep.mubr.f32.mxu0 0.0
    %416 = vmatmul.mubr.f32.gmra.mrb[0].mxu0 %v226
    %v417 = vpop.f32.mrb[0].mxu0
    %v418 = vadd.f32 %v77, %v417
    %v419 = vpop.f32.mrb[0].mxu0
    %v420 = vadd.f32 %v77, %v419
    %421 = vmatprep.mubr.f32.mxu0 0.0
    %422 = vmatmul.mubr.f32.gmra.mrb[0].mxu0 %v229
    %v423 = vpop.f32.mrb[0].mxu0
    %v424 = vadd.f32 %v82, %v423
    %v425 = vpop.f32.mrb[0].mxu0
    %v426 = vadd.f32 %v82, %v425
    %427 = vmatprep.mubr.f32.mxu0 0.0
    %428 = vmatmul.mubr.f32.gmra.mrb[0].mxu0 %v232
    %v429 = vpop.f32.mrb[0].mxu0
    %v430 = vadd.f32 %v87, %v429
    %v431 = vpop.f32.mrb[0].mxu0
    %v432 = vadd.f32 %v87, %v431
    %433 = vmatprep.mubr.f32.mxu0 0.0
    %434 = vmatmul.mubr.f32.gmra.mrb[0].mxu0 %v235
    %v435 = vpop.f32.mrb[0].mxu0
    %v436 = vadd.f32 %v92, %v435
    %v437 = vpop.f32.mrb[0].mxu0
    %v438 = vadd.f32 %v92, %v437
    %439 = vmatprep.mubr.f32.mxu0 0.0
    %440 = vmatmul.mubr.f32.gmra.mrb[0].mxu0 %v238
    %v441 = vpop.f32.mrb[0].mxu0
    %v442 = vadd.f32 %v97, %v441
    %v443 = vpop.f32.mrb[0].mxu0
    %v444 = vadd.f32 %v97, %v443
    %445 = vmatprep.mubr.f32.mxu0 0.0
    %446 = vmatmul.mubr.f32.gmra.mrb[0].mxu0 %v241
    %v447 = vpop.f32.mrb[0].mxu0
    %v448 = vadd.f32 %v102, %v447
    %v449 = vpop.f32.mrb[0].mxu0
    %v450 = vadd.f32 %v102, %v449
    %451 = vdwg.mxu0
    %v452 = vmax.f32 %v406, 0.0
    %v453 = vmax.f32 %v408, 0.0
    %v454 = vmax.f32 %v412, 0.0
    %v455 = vmax.f32 %v414, 0.0
    %v456 = vmax.f32 %v418, 0.0
    %v457 = vmax.f32 %v420, 0.0
    %v458 = vmax.f32 %v424, 0.0
    %v459 = vmax.f32 %v426, 0.0
    %v460 = vmax.f32 %v430, 0.0
    %v461 = vmax.f32 %v432, 0.0
    %v462 = vmax.f32 %v436, 0.0
    %v463 = vmax.f32 %v438, 0.0
    %v464 = vmax.f32 %v442, 0.0
    %v465 = vmax.f32 %v444, 0.0
    %v466 = vmax.f32 %v448, 0.0
    %v467 = vmax.f32 %v450, 0.0
    %vm468 = vcmask 523264
    %v470 = vsel %vm468, %v43, 0
    %v473 = vsel %vm468, %v44, 0
    %v476 = vsel %vm468, %v45, 0
    %v479 = vsel %vm468, %v46, 0
    %v482 = vsel %vm468, %v47, 0
    %v485 = vsel %vm468, %v48, 0
    %v488 = vsel %vm468, %v49, 0
    %v491 = vsel %vm468, %v50, 0
    %493 = vmatprep.subr.mxu0 %v453
    %494 = vmatpush1.msra.mxu0 %v452
    %495 = vmatprep.subr.mxu0 %v455
    %496 = vmatpush1.msra.mxu0 %v454
    %497 = vmatprep.subr.mxu0 %v457
    %498 = vmatpush1.msra.mxu0 %v456
    %499 = vmatprep.subr.mxu0 %v459
    %500 = vmatpush1.msra.mxu0 %v458
    %501 = vmatprep.subr.mxu0 %v461
    %502 = vmatpush1.msra.mxu0 %v460
    %503 = vmatprep.subr.mxu0 %v463
    %504 = vmatpush1.msra.mxu0 %v462
    %505 = vmatprep.subr.mxu0 %v465
    %506 = vmatpush1.msra.mxu0 %v464
    %507 = vmatprep.subr.mxu0 %v467
    %508 = vmatpush1.msra.mxu0 %v466
    %509 = vmatprep.subr.mxu0 0.0
    %510 = vmatpush1.msra.mxu0 0.0
    %511 = vmatprep.subr.mxu0 0.0
    %512 = vmatpush1.msra.mxu0 0.0
    %513 = vmatprep.subr.mxu0 0.0
    %514 = vmatpush1.msra.mxu0 0.0
    %515 = vmatprep.subr.mxu0 0.0
    %516 = vmatpush1.msra.mxu0 0.0
    %517 = vmatprep.subr.mxu0 0.0
    %518 = vmatpush1.msra.mxu0 0.0
    %519 = vmatprep.subr.mxu0 0.0
    %520 = vmatpush1.msra.mxu0 0.0
    %521 = vmatprep.subr.mxu0 0.0
    %522 = vmatpush1.msra.mxu0 0.0
    %523 = vmatprep.subr.mxu0 0.0
    %524 = vmatpush1.msra.mxu0 0.0
    %525 = vmatprep.subr.mxu0 0.0
    %526 = vmatpush1.msra.mxu0 0.0
    %527 = vmatprep.subr.mxu0 0.0
    %528 = vmatpush1.msra.mxu0 0.0
    %529 = vmatprep.subr.mxu0 0.0
    %530 = vmatpush1.msra.mxu0 0.0
    %531 = vmatprep.subr.mxu0 0.0
    %532 = vmatpush1.msra.mxu0 0.0
    %533 = vmatprep.subr.mxu0 0.0
    %534 = vmatpush1.msra.mxu0 0.0
    %535 = vmatprep.subr.mxu0 0.0
    %536 = vmatpush1.msra.mxu0 0.0
    %537 = vmatprep.subr.mxu0 0.0
    %538 = vmatpush1.msra.mxu0 0.0
    %539 = vmatprep.subr.mxu0 0.0
    %540 = vmatpush1.msra.mxu0 0.0
    %541 = vmatprep.subr.mxu0 0.0
    %542 = vmatpush1.msra.mxu0 0.0
    %543 = vmatprep.subr.mxu0 0.0
    %544 = vmatpush1.msra.mxu0 0.0
    %545 = vmatprep.subr.mxu0 0.0
    %546 = vmatpush1.msra.mxu0 0.0
    %547 = vmatprep.subr.mxu0 0.0
    %548 = vmatpush1.msra.mxu0 0.0
    %549 = vmatprep.subr.mxu0 0.0
    %550 = vmatpush1.msra.mxu0 0.0
    %551 = vmatprep.subr.mxu0 0.0
    %552 = vmatpush1.msra.mxu0 0.0
    %553 = vmatprep.subr.mxu0 0.0
    %554 = vmatpush1.msra.mxu0 0.0
    %555 = vmatprep.subr.mxu0 0.0
    %556 = vmatpush1.msra.mxu0 0.0
    %557 = vmatprep.mubr.f32.mxu0 0.0
    %558 = vmatmul.mubr.f32.gmra.mrb[0].mxu0 %v470
    %v559 = vpop.f32.mrb[0].mxu0
    %v560 = vadd.f32 %v115, %v559
    %v561 = vpop.f32.mrb[0].mxu0
    %v562 = vadd.f32 %v115, %v561
    %563 = vmatprep.mubr.f32.mxu0 0.0
    %564 = vmatmul.mubr.f32.gmra.mrb[0].mxu0 %v473
    %v565 = vpop.f32.mrb[0].mxu0
    %v566 = vadd.f32 %v120, %v565
    %v567 = vpop.f32.mrb[0].mxu0
    %v568 = vadd.f32 %v120, %v567
    %569 = vmatprep.mubr.f32.mxu0 0.0
    %570 = vmatmul.mubr.f32.gmra.mrb[0].mxu0 %v476
    %v571 = vpop.f32.mrb[0].mxu0
    %v572 = vadd.f32 %v125, %v571
    %v573 = vpop.f32.mrb[0].mxu0
    %v574 = vadd.f32 %v125, %v573
    %575 = vmatprep.mubr.f32.mxu0 0.0
    %576 = vmatmul.mubr.f32.gmra.mrb[0].mxu0 %v479
    %v577 = vpop.f32.mrb[0].mxu0
    %v578 = vadd.f32 %v130, %v577
    %v579 = vpop.f32.mrb[0].mxu0
    %v580 = vadd.f32 %v130, %v579
    %581 = vmatprep.mubr.f32.mxu0 0.0
    %582 = vmatmul.mubr.f32.gmra.mrb[0].mxu0 %v482
    %v583 = vpop.f32.mrb[0].mxu0
    %v584 = vadd.f32 %v135, %v583
    %v585 = vpop.f32.mrb[0].mxu0
    %v586 = vadd.f32 %v135, %v585
    %587 = vmatprep.mubr.f32.mxu0 0.0
    %588 = vmatmul.mubr.f32.gmra.mrb[0].mxu0 %v485
    %v589 = vpop.f32.mrb[0].mxu0
    %v590 = vadd.f32 %v140, %v589
    %v591 = vpop.f32.mrb[0].mxu0
    %v592 = vadd.f32 %v140, %v591
    %593 = vmatprep.mubr.f32.mxu0 0.0
    %594 = vmatmul.mubr.f32.gmra.mrb[0].mxu0 %v488
    %v595 = vpop.f32.mrb[0].mxu0
    %v596 = vadd.f32 %v145, %v595
    %v597 = vpop.f32.mrb[0].mxu0
    %v598 = vadd.f32 %v145, %v597
    %599 = vmatprep.mubr.f32.mxu0 0.0
    %600 = vmatmul.mubr.f32.gmra.mrb[0].mxu0 %v491
    %v601 = vpop.f32.mrb[0].mxu0
    %v602 = vadd.f32 %v150, %v601
    %v603 = vpop.f32.mrb[0].mxu0
    %v604 = vadd.f32 %v150, %v603
    %605 = vdwg.mxu0
    %v606 = vmax.f32 %v560, 0.0
    %v607 = vmax.f32 %v562, 0.0
    %v608 = vmax.f32 %v566, 0.0
    %v609 = vmax.f32 %v568, 0.0
    %v610 = vmax.f32 %v572, 0.0
    %v611 = vmax.f32 %v574, 0.0
    %v612 = vmax.f32 %v578, 0.0
    %v613 = vmax.f32 %v580, 0.0
    %v614 = vmax.f32 %v584, 0.0
    %v615 = vmax.f32 %v586, 0.0
    %v616 = vmax.f32 %v590, 0.0
    %v617 = vmax.f32 %v592, 0.0
    %v618 = vmax.f32 %v596, 0.0
    %v619 = vmax.f32 %v598, 0.0
    %v620 = vmax.f32 %v602, 0.0
    %v621 = vmax.f32 %v604, 0.0
    %v623 = vsel %vm468, %v51, 0
    %v626 = vsel %vm468, %v52, 0
    %v629 = vsel %vm468, %v53, 0
    %v632 = vsel %vm468, %v54, 0
    %634 = vmatprep.subr.mxu0 %v607
    %635 = vmatpush1.msra.mxu0 %v606
    %636 = vmatprep.subr.mxu0 %v609
    %637 = vmatpush1.msra.mxu0 %v608
    %638 = vmatprep.subr.mxu0 %v611
    %639 = vmatpush1.msra.mxu0 %v610
    %640 = vmatprep.subr.mxu0 %v613
    %641 = vmatpush1.msra.mxu0 %v612
    %642 = vmatprep.subr.mxu0 %v615
    %643 = vmatpush1.msra.mxu0 %v614
    %644 = vmatprep.subr.mxu0 %v617
    %645 = vmatpush1.msra.mxu0 %v616
    %646 = vmatprep.subr.mxu0 %v619
    %647 = vmatpush1.msra.mxu0 %v618
    %648 = vmatprep.subr.mxu0 %v621
    %649 = vmatpush1.msra.mxu0 %v620
    %650 = vmatprep.subr.mxu0 0.0
    %651 = vmatpush1.msra.mxu0 0.0
    %652 = vmatprep.subr.mxu0 0.0
    %653 = vmatpush1.msra.mxu0 0.0
    %654 = vmatprep.subr.mxu0 0.0
    %655 = vmatpush1.msra.mxu0 0.0
    %656 = vmatprep.subr.mxu0 0.0
    %657 = vmatpush1.msra.mxu0 0.0
    %658 = vmatprep.subr.mxu0 0.0
    %659 = vmatpush1.msra.mxu0 0.0
    %660 = vmatprep.subr.mxu0 0.0
    %661 = vmatpush1.msra.mxu0 0.0
    %662 = vmatprep.subr.mxu0 0.0
    %663 = vmatpush1.msra.mxu0 0.0
    %664 = vmatprep.subr.mxu0 0.0
    %665 = vmatpush1.msra.mxu0 0.0
    %666 = vmatprep.subr.mxu0 0.0
    %667 = vmatpush1.msra.mxu0 0.0
    %668 = vmatprep.subr.mxu0 0.0
    %669 = vmatpush1.msra.mxu0 0.0
    %670 = vmatprep.subr.mxu0 0.0
    %671 = vmatpush1.msra.mxu0 0.0
    %672 = vmatprep.subr.mxu0 0.0
    %673 = vmatpush1.msra.mxu0 0.0
    %674 = vmatprep.subr.mxu0 0.0
    %675 = vmatpush1.msra.mxu0 0.0
    %676 = vmatprep.subr.mxu0 0.0
    %677 = vmatpush1.msra.mxu0 0.0
    %678 = vmatprep.subr.mxu0 0.0
    %679 = vmatpush1.msra.mxu0 0.0
    %680 = vmatprep.subr.mxu0 0.0
    %681 = vmatpush1.msra.mxu0 0.0
    %682 = vmatprep.subr.mxu0 0.0
    %683 = vmatpush1.msra.mxu0 0.0
    %684 = vmatprep.subr.mxu0 0.0
    %685 = vmatpush1.msra.mxu0 0.0
    %686 = vmatprep.subr.mxu0 0.0
    %687 = vmatpush1.msra.mxu0 0.0
    %688 = vmatprep.subr.mxu0 0.0
    %689 = vmatpush1.msra.mxu0 0.0
    %690 = vmatprep.subr.mxu0 0.0
    %691 = vmatpush1.msra.mxu0 0.0
    %692 = vmatprep.subr.mxu0 0.0
    %693 = vmatpush1.msra.mxu0 0.0
    %694 = vmatprep.subr.mxu0 0.0
    %695 = vmatpush1.msra.mxu0 0.0
    %696 = vmatprep.subr.mxu0 0.0
    %697 = vmatpush1.msra.mxu0 0.0
    %698 = vmatprep.mubr.f32.mxu0 0.0
    %699 = vmatmul.mubr.f32.gmra.mrb[0].mxu0 %v623
    %v700 = vpop.f32.mrb[0].mxu0
    %v701 = vadd.f32 %v159, %v700
    %v702 = vpop.f32.mrb[0].mxu0
    %v703 = vadd.f32 %v159, %v702
    %704 = vmatprep.mubr.f32.mxu0 0.0
    %705 = vmatmul.mubr.f32.gmra.mrb[0].mxu0 %v626
    %v706 = vpop.f32.mrb[0].mxu0
    %v707 = vadd.f32 %v164, %v706
    %v708 = vpop.f32.mrb[0].mxu0
    %v709 = vadd.f32 %v164, %v708
    %710 = vmatprep.mubr.f32.mxu0 0.0
    %711 = vmatmul.mubr.f32.gmra.mrb[0].mxu0 %v629
    %v712 = vpop.f32.mrb[0].mxu0
    %v713 = vadd.f32 %v169, %v712
    %v714 = vpop.f32.mrb[0].mxu0
    %v715 = vadd.f32 %v169, %v714
    %716 = vmatprep.mubr.f32.mxu0 0.0
    %717 = vmatmul.mubr.f32.gmra.mrb[0].mxu0 %v632
    %v718 = vpop.f32.mrb[0].mxu0
    %v719 = vadd.f32 %v174, %v718
    %v720 = vpop.f32.mrb[0].mxu0
    %v721 = vadd.f32 %v174, %v720
    %722 = vdwg.mxu0
    %v723 = vmax.f32 %v701, 0.0
    %v724 = vmax.f32 %v703, 0.0
    %v725 = vmax.f32 %v707, 0.0
    %v726 = vmax.f32 %v709, 0.0
    %v727 = vmax.f32 %v713, 0.0
    %v728 = vmax.f32 %v715, 0.0
    %v729 = vmax.f32 %v719, 0.0
    %v730 = vmax.f32 %v721, 0.0
    %vm731 = vcmask 261120
    %v733 = vsel %vm731, %v55, 0
    %735 = vmatprep.subr.mxu0 %v724
    %736 = vmatpush1.msra.mxu0 %v723
    %737 = vmatprep.subr.mxu0 %v726
    %738 = vmatpush1.msra.mxu0 %v725
    %739 = vmatprep.subr.mxu0 %v728
    %740 = vmatpush1.msra.mxu0 %v727
    %741 = vmatprep.subr.mxu0 %v730
    %742 = vmatpush1.msra.mxu0 %v729
    %743 = vmatprep.subr.mxu0 0.0
    %744 = vmatpush1.msra.mxu0 0.0
    %745 = vmatprep.subr.mxu0 0.0
    %746 = vmatpush1.msra.mxu0 0.0
    %747 = vmatprep.subr.mxu0 0.0
    %748 = vmatpush1.msra.mxu0 0.0
    %749 = vmatprep.subr.mxu0 0.0
    %750 = vmatpush1.msra.mxu0 0.0
    %751 = vmatprep.subr.mxu0 0.0
    %752 = vmatpush1.msra.mxu0 0.0
    %753 = vmatprep.subr.mxu0 0.0
    %754 = vmatpush1.msra.mxu0 0.0
    %755 = vmatprep.subr.mxu0 0.0
    %756 = vmatpush1.msra.mxu0 0.0
    %757 = vmatprep.subr.mxu0 0.0
    %758 = vmatpush1.msra.mxu0 0.0
    %759 = vmatprep.subr.mxu0 0.0
    %760 = vmatpush1.msra.mxu0 0.0
    %761 = vmatprep.subr.mxu0 0.0
    %762 = vmatpush1.msra.mxu0 0.0
    %763 = vmatprep.subr.mxu0 0.0
    %764 = vmatpush1.msra.mxu0 0.0
    %765 = vmatprep.subr.mxu0 0.0
    %766 = vmatpush1.msra.mxu0 0.0
    %767 = vmatprep.subr.mxu0 0.0
    %768 = vmatpush1.msra.mxu0 0.0
    %769 = vmatprep.subr.mxu0 0.0
    %770 = vmatpush1.msra.mxu0 0.0
    %771 = vmatprep.subr.mxu0 0.0
    %772 = vmatpush1.msra.mxu0 0.0
    %773 = vmatprep.subr.mxu0 0.0
    %774 = vmatpush1.msra.mxu0 0.0
    %775 = vmatprep.subr.mxu0 0.0
    %776 = vmatpush1.msra.mxu0 0.0
    %777 = vmatprep.subr.mxu0 0.0
    %778 = vmatpush1.msra.mxu0 0.0
    %779 = vmatprep.subr.mxu0 0.0
    %780 = vmatpush1.msra.mxu0 0.0
    %781 = vmatprep.subr.mxu0 0.0
    %782 = vmatpush1.msra.mxu0 0.0
    %783 = vmatprep.subr.mxu0 0.0
    %784 = vmatpush1.msra.mxu0 0.0
    %785 = vmatprep.subr.mxu0 0.0
    %786 = vmatpush1.msra.mxu0 0.0
    %787 = vmatprep.subr.mxu0 0.0
    %788 = vmatpush1.msra.mxu0 0.0
    %789 = vmatprep.subr.mxu0 0.0
    %790 = vmatpush1.msra.mxu0 0.0
    %791 = vmatprep.subr.mxu0 0.0
    %792 = vmatpush1.msra.mxu0 0.0
    %793 = vmatprep.subr.mxu0 0.0
    %794 = vmatpush1.msra.mxu0 0.0
    %795 = vmatprep.subr.mxu0 0.0
    %796 = vmatpush1.msra.mxu0 0.0
    %797 = vmatprep.subr.mxu0 0.0
    %798 = vmatpush1.msra.mxu0 0.0
    %799 = vmatprep.mubr.f32.mxu0 0.0
    %800 = vmatmul.mubr.f32.gmra.mrb[0].mxu0 %v733
    %v801 = vpop.f32.mrb[0].mxu0
    %v802 = vadd.f32 %v185, %v801
    %v803 = vpop.f32.mrb[0].mxu0
    %v804 = vadd.f32 %v185, %v803
    %805 = vdwg.mxu0
    %v808 = vcombine.low %v802, %v804
    %v810 = vunpack.c.l.s4 1966171168
    %v811 = vunpack.c.0.s8 %v810
    %v812 = vlaneseq
    %v813 = vshrl.u32 %v812, 7
    %v814 = vsub.s32 %v811, %v813
    %v815 = vrot.slane %v808, %v814
    %v817 = vunpack.c.l.s4 1966171168
    %v818 = vunpack.c.0.s8 %v817
    %v819 = vlaneseq
    %v820 = vshrl.u32 %v819, 7
    %v821 = vsub.s32 %v818, %v820
    %v822 = vrot.slane %v815, %v821
    %v824 = vlaneseq
    %vm825 = vcmp.ge.s32.totalorder %v824, 0
    %vm826 = vcmp.lt.s32.totalorder %v824, 256
    %vm827 = vmand %vm825, %vm826
    %828 = vst.msk [vmem:[#allocation3] sm:$0x3] %vm827, %v822
    // Predicated region
    $region38: #{tpu_custom_call.1} parent=1 // pred_check
      _
    $region39: #{tpu_custom_call.1} parent=1 // pred_check_branch
      %830 = sbr.rel (0) target = $region41
    $region40: #{tpu_custom_call.1} parent=1 // pred_region
      %s832 = ssub.s32 32, 32
      %833 = vsyncadd [#allocation4], %s832
      %s835 = sshll.u32 [#allocation3], 4
      %s836 = int_to_ptr.vmem [resolvable:$true] %s835
      %838 = dma.vmem_to_hbm [thread:$0]  %s836, 32, %s9, [#allocation4]
    $region41: #{tpu_custom_call.1} parent=1 // pred_fallthru
      _
    // Predicated region
    $region42: #{tpu_custom_call.1} parent=1 // pred_check
      _
    $region43: #{tpu_custom_call.1} parent=1 // pred_check_branch
      %840 = sbr.rel (0) target = $region45
    $region44: #{tpu_custom_call.1} parent=1 // pred_region
      %841 = dma.done [#allocation4], 32
    $region45: #{tpu_custom_call.1} parent=1 // pred_fallthru
      _
    %842 = vsyncpa [#allocation4], 1

</llo_original>
